<compile_context>
chip_gen: v6e
topology: v6e:2x2x1
jax: 0.10.0
libtpu: 0.0.40
codegen_flags: <defaults>
</compile_context>

<pallas_src>
import numpy as np
import jax
import jax.numpy as jnp
from jax import lax
from jax.experimental import pallas as pl
from jax.experimental.pallas import tpu as pltpu


def _vmem_limit_bytes():
    """Scoped-VMEM request derived from the chip; conservative when unknown."""
    try:
        cap = pltpu.get_tpu_info().vmem_capacity_bytes
    except Exception:
        cap = None
    if cap is not None and cap >= 100 * 1024 * 1024:      # v5e / v6e: 128 MiB VMEM
        return 96 * 1024 * 1024
    return 48 * 1024 * 1024                               # v7x (64 MiB) / unknown


_VMEM_LIMIT = _vmem_limit_bytes()
_TILE_BUDGET = int(0.8 * _VMEM_LIMIT)


def _pick_row_tile(n_rows, per_row_bytes, fixed_bytes, *, min_mult=8, prefer_tiles=2):
    """Largest row tile (divisor of n_rows, multiple of min_mult) whose working
    set fits the budget, preferring >= prefer_tiles tiles so the 'parallel'
    axis can still shard across TensorCores (v7x megacore)."""
    avail = max(_TILE_BUDGET - fixed_bytes, 0)
    cands = [t for t in (1024, 512, 256, 128, 64, 32, 16, 8)
             if t % min_mult == 0 and t <= n_rows and n_rows % t == 0]
    for t in cands:
        if t * per_row_bytes <= avail and n_rows // t >= prefer_tiles:
            return t
    for t in cands:
        if t * per_row_bytes <= avail:
            return t
    # Full-array block is always legal (demo-sized N lands here on purpose).
    return n_rows


def multi_head_attn(x, params):
    """Returns (out_nf (N, D) f32, weight (N_dst, N_src) f32)."""
    N, D = x.shape
    H = params["wq"].shape[0]
    HD = H * D
    HD3 = 3 * HD
    inv_nh = 1.0 / H

    # ---- host-side weight packing (layout plumbing; nn.Linear is y = x @ W.T + b) ----
    wq_t = jnp.transpose(params["wq"], (0, 2, 1))                 # (H, D_in, D_out)
    wk_t = jnp.transpose(params["wk"], (0, 2, 1))
    wv_t = jnp.transpose(params["wv"], (0, 2, 1))
    w_all = jnp.stack([wq_t, wk_t, wv_t], axis=0)                 # (3, H, D_in, D_out)
    # fused QKV weight, column index = t*H*D + h*D + d_out
    w_qkv = jnp.transpose(w_all, (2, 0, 1, 3)).reshape(D, HD3).astype(jnp.bfloat16)
    b_qkv = jnp.stack([params["bq"], params["bk"], params["bv"]], axis=0)
    b_qkv = b_qkv.reshape(1, HD3).astype(jnp.float32)
    wo_t = jnp.transpose(params["wo"]).astype(jnp.bfloat16)       # (H*D, D), pre-transposed
    bo = params["bo"].astype(jnp.float32)                         # (1, D)
    x_bf = x.astype(jnp.bfloat16)

    # ------------ kernel 1: fused QKV projection, head-major outputs ------------
    def _qkv_kernel(x_ref, w_ref, b_ref, q_ref, k_ref, v_ref):
        acc = jnp.dot(x_ref[...], w_ref[...],
                      preferred_element_type=jnp.float32) + b_ref[...]
        outs = (q_ref, k_ref, v_ref)
        # static lane slices of the fused result go straight to head-major refs
        for t in range(3):
            for h in range(H):
                lo = (t * H + h) * D
                outs[t][h, :, :] = acc[:, lo:lo + D].astype(outs[t].dtype)

    # sizing (bf16 bytes): x tile + 3 head-major out tiles (double-buffered)
    # + the f32 (TP, 3*H*D) accumulator; W_qkv stays resident.
    qkv_fixed = 2 * D * HD3 * 2 + 4 * HD3
    qkv_per_row = 2 * D * 2 + 3 * 2 * HD * 2 + HD3 * 4
    TP = _pick_row_tile(N, qkv_per_row, qkv_fixed, min_mult=16)

    q_all, k_all, v_all = pl.pallas_call(
        _qkv_kernel,
        out_shape=(jax.ShapeDtypeStruct((H, N, D), jnp.bfloat16),
                   jax.ShapeDtypeStruct((H, N, D), jnp.bfloat16),
                   jax.ShapeDtypeStruct((H, N, D), jnp.bfloat16)),
        grid_spec=pltpu.PrefetchScalarGridSpec(
            num_scalar_prefetch=0,
            grid=(N // TP,),
            in_specs=[
                pl.BlockSpec((TP, D), lambda i: (i, 0)),
                pl.BlockSpec((D, HD3), lambda i: (0, 0)),
                pl.BlockSpec((1, HD3), lambda i: (0, 0)),
            ],
            out_specs=[
                pl.BlockSpec((H, TP, D), lambda i: (0, i, 0)),
                pl.BlockSpec((H, TP, D), lambda i: (0, i, 0)),
                pl.BlockSpec((H, TP, D), lambda i: (0, i, 0)),
            ],
        ),
        compiler_params=pltpu.CompilerParams(
            dimension_semantics=("parallel",),
            vmem_limit_bytes=_VMEM_LIMIT),
    )(x_bf, w_qkv, b_qkv)

    # ------------ kernel 2: attention + deferred output projection ------------
    def _attn_kernel(q_ref, k_ref, v_ref, wo_ref, bo_ref, out_ref, w_ref, wv_ref):
        w_acc = jnp.zeros(w_ref.shape, jnp.float32)
        # Static head loop: H is a small compile-time constant; K/V blocks have a
        # constant index so they are fetched once and stay VMEM-resident.
        for h in range(H):
            q = q_ref[h]                                          # (TM, D) bf16
            k = k_ref[h]                                          # (N,  D) bf16
            v = v_ref[h]                                          # (N,  D) bf16
            # scores = q @ k.T (no in-kernel transpose), f32 accumulation
            s = lax.dot_general(q, k,
                                dimension_numbers=(((1,), (1,)), ((), ())),
                                preferred_element_type=jnp.float32)  # (TM, N)
            m = jnp.max(s, axis=-1, keepdims=True)
            p = jnp.exp(s - m)
            l = jnp.sum(p, axis=-1, keepdims=True)
            # EUP approx reciprocal, folded with the 1/H head mean on the weight
            # path (rows of `weight` sum to 1 only up to ~2^-12 relative error).
            inv = pl.reciprocal(l, approx=True)
            w_acc = w_acc + p * (inv * inv_nh)
            pv = jnp.dot(p.astype(v.dtype), v,
                         preferred_element_type=jnp.float32)         # (TM, D)
            wv_ref[:, h * D:(h + 1) * D] = (pv * inv).astype(wv_ref.dtype)
        w_ref[...] = w_acc                                        # single write per tile
        # single (TM, H*D) x (H*D, D) output projection (full-depth MXU pass)
        out_ref[...] = jnp.dot(wv_ref[...], wo_ref[...],
                               preferred_element_type=jnp.float32) + bo_ref[...]

    # resident: K + V ((H, N, D) bf16, counting 2 pipeline buffers each) + Wo + bias
    attn_fixed = 2 * 2 * H * N * D * 2 + 2 * HD * D * 2 + 4 * D
    # per output row: Q block + out/weight blocks (double-buffered) + wv scratch
    # + ~4 live (row, N) f32 softmax temporaries (s, p, w_acc, exp temp).
    attn_per_row = 2 * H * D * 2 + 2 * D * 4 + 2 * N * 4 + HD * 2 + 4 * N * 4
    TM = _pick_row_tile(N, attn_per_row, attn_fixed, min_mult=8)

    out_nf, weight = pl.pallas_call(
        _attn_kernel,
        out_shape=(jax.ShapeDtypeStruct((N, D), jnp.float32),
                   jax.ShapeDtypeStruct((N, N), jnp.float32)),
        grid_spec=pltpu.PrefetchScalarGridSpec(
            num_scalar_prefetch=0,
            grid=(N // TM,),
            in_specs=[
                pl.BlockSpec((H, TM, D), lambda r: (0, r, 0)),    # Q row tile, all heads
                pl.BlockSpec((H, N, D), lambda r: (0, 0, 0)),     # K resident (all heads)
                pl.BlockSpec((H, N, D), lambda r: (0, 0, 0)),     # V resident (all heads)
                pl.BlockSpec((HD, D), lambda r: (0, 0)),          # Wo^T, resident
                pl.BlockSpec((1, D), lambda r: (0, 0)),           # bo
            ],
            out_specs=[
                pl.BlockSpec((TM, D), lambda r: (r, 0)),
                pl.BlockSpec((TM, N), lambda r: (r, 0)),
            ],
            scratch_shapes=[pltpu.VMEM((TM, HD), jnp.bfloat16)],  # concat_h(wv_h)
        ),
        compiler_params=pltpu.CompilerParams(
            dimension_semantics=("parallel",),
            vmem_limit_bytes=_VMEM_LIMIT),
    )(q_all, k_all, v_all, wo_t, bo)
    return out_nf, weight


def init_params(key, model_dim, num_heads):
    """Deterministic init matching nn.Linear's U(-1/sqrt(fan_in), 1/sqrt(fan_in))."""
    D, H = model_dim, num_heads
    ks = jax.random.split(key, 8)
    b = 1.0 / np.sqrt(D)
    wq = jax.random.uniform(ks[0], (H, D, D), jnp.float32, -b, b)
    bq = jax.random.uniform(ks[1], (H, 1, D), jnp.float32, -b, b)
    wk = jax.random.uniform(ks[2], (H, D, D), jnp.float32, -b, b)
    bk = jax.random.uniform(ks[3], (H, 1, D), jnp.float32, -b, b)
    wv = jax.random.uniform(ks[4], (H, D, D), jnp.float32, -b, b)
    bv = jax.random.uniform(ks[5], (H, 1, D), jnp.float32, -b, b)
    bo_bound = 1.0 / np.sqrt(D * H)                               # O: Linear(D*H, D)
    wo = jax.random.uniform(ks[6], (D, H * D), jnp.float32, -bo_bound, bo_bound)
    bo = jax.random.uniform(ks[7], (1, D), jnp.float32, -bo_bound, bo_bound)
    return dict(wq=wq, bq=bq, wk=wk, bk=bk, wv=wv, bv=bv, wo=wo, bo=bo)


def reference(x, params):
    """Pure-numpy (float64) reference of the PyTorch forward on a complete graph."""
    x64 = np.asarray(x, np.float64)
    H = params["wq"].shape[0]
    wv_list, w_list = [], []
    for h in range(H):
        Wq = np.asarray(params["wq"][h], np.float64); bq = np.asarray(params["bq"][h, 0], np.float64)
        Wk = np.asarray(params["wk"][h], np.float64); bk = np.asarray(params["bk"][h, 0], np.float64)
        Wv = np.asarray(params["wv"][h], np.float64); bv = np.asarray(params["bv"][h, 0], np.float64)
        q = x64 @ Wq.T + bq
        k = x64 @ Wk.T + bk
        v = x64 @ Wv.T + bv
        s = q @ k.T
        s = s - s.max(-1, keepdims=True)
        p = np.exp(s)
        a = p / p.sum(-1, keepdims=True)
        wv_list.append(a @ v)
        w_list.append(a)
    o_in = np.concatenate(wv_list, axis=-1)
    out = o_in @ np.asarray(params["wo"], np.float64).T + np.asarray(params["bo"][0], np.float64)
    w = np.mean(np.stack(w_list, 0), 0)
    return out, w


if __name__ == "__main__":
    N, D, H = 8, 32, 2      # nodes, model_dim, num_heads (small demo shapes)
    key = jax.random.PRNGKey(0)
    kx, kp = jax.random.split(key)
    x = jax.random.normal(kx, (N, D), jnp.float32)
    params = init_params(kp, D, H)

    mha = jax.jit(multi_head_attn)
    out_nf, weight = jax.block_until_ready(mha(x, params))

    ref_out, ref_w = reference(x, params)
    # bf16 MXU operands + approx reciprocal -> slightly looser tolerance than pure f32
    np.testing.assert_allclose(np.asarray(out_nf), ref_out, rtol=2e-2, atol=2e-2)
    np.testing.assert_allclose(np.asarray(weight), ref_w, rtol=2e-2, atol=2e-2)

    print("KERNEL_OK")
</pallas_src>

<mosaic_0001>
module attributes {stable_mosaic.version = 11 : i64} {
  func.func @_qkv_kernel(%arg0: i32, %arg1: memref<8x32xbf16, #tpu.memory_space<vmem>>, %arg2: memref<32x192xbf16, #tpu.memory_space<vmem>>, %arg3: memref<1x192xf32, #tpu.memory_space<vmem>>, %arg4: memref<2x8x32xbf16, #tpu.memory_space<vmem>>, %arg5: memref<2x8x32xbf16, #tpu.memory_space<vmem>>, %arg6: memref<2x8x32xbf16, #tpu.memory_space<vmem>>) attributes {dimension_semantics = [#tpu.dimension_semantics<parallel>], iteration_bounds = array<i64: 1>, scalar_prefetch = 0 : i64, scratch_operands = 0 : i64, tpu.core_type = #tpu.core_type<tc>, window_params = [{transform_indices = @transform_0, window_bounds = array<i64: 8, 32>}, {pipeline_mode = #tpu.pipeline_mode<synchronous>, transform_indices = @transform_1, window_bounds = array<i64: 32, 192>}, {pipeline_mode = #tpu.pipeline_mode<synchronous>, transform_indices = @transform_2, window_bounds = array<i64: 1, 192>}, {transform_indices = @transform_3, window_bounds = array<i64: 2, 8, 32>}, {transform_indices = @transform_4, window_bounds = array<i64: 2, 8, 32>}, {transform_indices = @transform_5, window_bounds = array<i64: 2, 8, 32>}]} {
    %c0 = arith.constant 0 : index
    %c0_0 = arith.constant 0 : index
    %0 = vector.load %arg1[%c0, %c0_0] : memref<8x32xbf16, #tpu.memory_space<vmem>>, vector<8x32xbf16>
    %c0_1 = arith.constant 0 : index
    %c0_2 = arith.constant 0 : index
    %1 = vector.load %arg2[%c0_1, %c0_2] : memref<32x192xbf16, #tpu.memory_space<vmem>>, vector<32x192xbf16>
    %cst = arith.constant dense<0.000000e+00> : vector<8x192xf32>
    %2 = tpu.matmul %0, %1, %cst {dimension_numbers = #tpu.dot_dimension_numbers<[1], [0], [0], [1], [0, 0, 1, 1], [], []>} : vector<8x32xbf16>, vector<32x192xbf16>, vector<8x192xf32> -> vector<8x192xf32>
    %c0_3 = arith.constant 0 : index
    %c0_4 = arith.constant 0 : index
    %3 = vector.load %arg3[%c0_3, %c0_4] : memref<1x192xf32, #tpu.memory_space<vmem>>, vector<1x192xf32>
    %4 = vector.broadcast %3 : vector<1x192xf32> to vector<8x192xf32>
    %5 = arith.addf %2, %4 : vector<8x192xf32>
    %6 = vector.extract_strided_slice %5 {offsets = [0, 0], sizes = [8, 32], strides = [1, 1]} : vector<8x192xf32> to vector<8x32xf32>
    %7 = arith.truncf %6 : vector<8x32xf32> to vector<8x32xbf16>
    %c0_5 = arith.constant 0 : index
    %c0_6 = arith.constant 0 : index
    %c0_7 = arith.constant 0 : index
    %8 = vector.load %arg4[%c0_5, %c0_6, %c0_7] : memref<2x8x32xbf16, #tpu.memory_space<vmem>>, vector<1x8x32xbf16>
    %9 = vector.shape_cast %8 : vector<1x8x32xbf16> to vector<8x32xbf16>
    %10 = vector.shape_cast %7 : vector<8x32xbf16> to vector<1x8x32xbf16>
    tpu.vector_store %arg4[%c0_5, %c0_6, %c0_7], %10 {strides = array<i32>} : memref<2x8x32xbf16, #tpu.memory_space<vmem>>, vector<1x8x32xbf16>,
    %11 = vector.extract_strided_slice %5 {offsets = [0, 32], sizes = [8, 32], strides = [1, 1]} : vector<8x192xf32> to vector<8x32xf32>
    %12 = arith.truncf %11 : vector<8x32xf32> to vector<8x32xbf16>
    %c1 = arith.constant 1 : index
    %c0_8 = arith.constant 0 : index
    %c0_9 = arith.constant 0 : index
    %13 = vector.load %arg4[%c1, %c0_8, %c0_9] : memref<2x8x32xbf16, #tpu.memory_space<vmem>>, vector<1x8x32xbf16>
    %14 = vector.shape_cast %13 : vector<1x8x32xbf16> to vector<8x32xbf16>
    %15 = vector.shape_cast %12 : vector<8x32xbf16> to vector<1x8x32xbf16>
    tpu.vector_store %arg4[%c1, %c0_8, %c0_9], %15 {strides = array<i32>} : memref<2x8x32xbf16, #tpu.memory_space<vmem>>, vector<1x8x32xbf16>,
    %16 = vector.extract_strided_slice %5 {offsets = [0, 64], sizes = [8, 32], strides = [1, 1]} : vector<8x192xf32> to vector<8x32xf32>
    %17 = arith.truncf %16 : vector<8x32xf32> to vector<8x32xbf16>
    %c0_10 = arith.constant 0 : index
    %c0_11 = arith.constant 0 : index
    %c0_12 = arith.constant 0 : index
    %18 = vector.load %arg5[%c0_10, %c0_11, %c0_12] : memref<2x8x32xbf16, #tpu.memory_space<vmem>>, vector<1x8x32xbf16>
    %19 = vector.shape_cast %18 : vector<1x8x32xbf16> to vector<8x32xbf16>
    %20 = vector.shape_cast %17 : vector<8x32xbf16> to vector<1x8x32xbf16>
    tpu.vector_store %arg5[%c0_10, %c0_11, %c0_12], %20 {strides = array<i32>} : memref<2x8x32xbf16, #tpu.memory_space<vmem>>, vector<1x8x32xbf16>,
    %21 = vector.extract_strided_slice %5 {offsets = [0, 96], sizes = [8, 32], strides = [1, 1]} : vector<8x192xf32> to vector<8x32xf32>
    %22 = arith.truncf %21 : vector<8x32xf32> to vector<8x32xbf16>
    %c1_13 = arith.constant 1 : index
    %c0_14 = arith.constant 0 : index
    %c0_15 = arith.constant 0 : index
    %23 = vector.load %arg5[%c1_13, %c0_14, %c0_15] : memref<2x8x32xbf16, #tpu.memory_space<vmem>>, vector<1x8x32xbf16>
    %24 = vector.shape_cast %23 : vector<1x8x32xbf16> to vector<8x32xbf16>
    %25 = vector.shape_cast %22 : vector<8x32xbf16> to vector<1x8x32xbf16>
    tpu.vector_store %arg5[%c1_13, %c0_14, %c0_15], %25 {strides = array<i32>} : memref<2x8x32xbf16, #tpu.memory_space<vmem>>, vector<1x8x32xbf16>,
    %26 = vector.extract_strided_slice %5 {offsets = [0, 128], sizes = [8, 32], strides = [1, 1]} : vector<8x192xf32> to vector<8x32xf32>
    %27 = arith.truncf %26 : vector<8x32xf32> to vector<8x32xbf16>
    %c0_16 = arith.constant 0 : index
    %c0_17 = arith.constant 0 : index
    %c0_18 = arith.constant 0 : index
    %28 = vector.load %arg6[%c0_16, %c0_17, %c0_18] : memref<2x8x32xbf16, #tpu.memory_space<vmem>>, vector<1x8x32xbf16>
    %29 = vector.shape_cast %28 : vector<1x8x32xbf16> to vector<8x32xbf16>
    %30 = vector.shape_cast %27 : vector<8x32xbf16> to vector<1x8x32xbf16>
    tpu.vector_store %arg6[%c0_16, %c0_17, %c0_18], %30 {strides = array<i32>} : memref<2x8x32xbf16, #tpu.memory_space<vmem>>, vector<1x8x32xbf16>,
    %31 = vector.extract_strided_slice %5 {offsets = [0, 160], sizes = [8, 32], strides = [1, 1]} : vector<8x192xf32> to vector<8x32xf32>
    %32 = arith.truncf %31 : vector<8x32xf32> to vector<8x32xbf16>
    %c1_19 = arith.constant 1 : index
    %c0_20 = arith.constant 0 : index
    %c0_21 = arith.constant 0 : index
    %33 = vector.load %arg6[%c1_19, %c0_20, %c0_21] : memref<2x8x32xbf16, #tpu.memory_space<vmem>>, vector<1x8x32xbf16>
    %34 = vector.shape_cast %33 : vector<1x8x32xbf16> to vector<8x32xbf16>
    %35 = vector.shape_cast %32 : vector<8x32xbf16> to vector<1x8x32xbf16>
    tpu.vector_store %arg6[%c1_19, %c0_20, %c0_21], %35 {strides = array<i32>} : memref<2x8x32xbf16, #tpu.memory_space<vmem>>, vector<1x8x32xbf16>,
    return
  }
  func.func @transform_0(%arg0: i32) -> (i32, i32) {
    %c0_i32 = arith.constant 0 : i32
    %c0_i32_0 = arith.constant 0 : i32
    return %arg0, %c0_i32 : i32, i32
  }
  func.func @transform_1(%arg0: i32) -> (i32, i32) {
    %c0_i32 = arith.constant 0 : i32
    %c0_i32_0 = arith.constant 0 : i32
    %c0_i32_1 = arith.constant 0 : i32
    return %c0_i32, %c0_i32_0 : i32, i32
  }
  func.func @transform_2(%arg0: i32) -> (i32, i32) {
    %c0_i32 = arith.constant 0 : i32
    %c0_i32_0 = arith.constant 0 : i32
    %c0_i32_1 = arith.constant 0 : i32
    return %c0_i32, %c0_i32_0 : i32, i32
  }
  func.func @transform_3(%arg0: i32) -> (i32, i32, i32) {
    %c0_i32 = arith.constant 0 : i32
    %c0_i32_0 = arith.constant 0 : i32
    %c0_i32_1 = arith.constant 0 : i32
    return %c0_i32, %arg0, %c0_i32_0 : i32, i32, i32
  }
  func.func @transform_4(%arg0: i32) -> (i32, i32, i32) {
    %c0_i32 = arith.constant 0 : i32
    %c0_i32_0 = arith.constant 0 : i32
    %c0_i32_1 = arith.constant 0 : i32
    return %c0_i32, %arg0, %c0_i32_0 : i32, i32, i32
  }
  func.func @transform_5(%arg0: i32) -> (i32, i32, i32) {
    %c0_i32 = arith.constant 0 : i32
    %c0_i32_0 = arith.constant 0 : i32
    %c0_i32_1 = arith.constant 0 : i32
    return %c0_i32, %arg0, %c0_i32_0 : i32, i32, i32
  }
}

module attributes {stable_mosaic.version = 11 : i64} {
  func.func @_attn_kernel(%arg0: i32, %arg1: memref<2x8x32xbf16, #tpu.memory_space<vmem>>, %arg2: memref<2x8x32xbf16, #tpu.memory_space<vmem>>, %arg3: memref<2x8x32xbf16, #tpu.memory_space<vmem>>, %arg4: memref<64x32xbf16, #tpu.memory_space<vmem>>, %arg5: memref<1x32xf32, #tpu.memory_space<vmem>>, %arg6: memref<8x32xf32, #tpu.memory_space<vmem>>, %arg7: memref<8x8xf32, #tpu.memory_space<vmem>>, %arg8: memref<8x64xbf16, #tpu.memory_space<vmem>>) attributes {dimension_semantics = [#tpu.dimension_semantics<parallel>], iteration_bounds = array<i64: 1>, scalar_prefetch = 0 : i64, scratch_operands = 1 : i64, tpu.core_type = #tpu.core_type<tc>, window_params = [{transform_indices = @transform_0, window_bounds = array<i64: 2, 8, 32>}, {pipeline_mode = #tpu.pipeline_mode<synchronous>, transform_indices = @transform_1, window_bounds = array<i64: 2, 8, 32>}, {pipeline_mode = #tpu.pipeline_mode<synchronous>, transform_indices = @transform_2, window_bounds = array<i64: 2, 8, 32>}, {pipeline_mode = #tpu.pipeline_mode<synchronous>, transform_indices = @transform_3, window_bounds = array<i64: 64, 32>}, {pipeline_mode = #tpu.pipeline_mode<synchronous>, transform_indices = @transform_4, window_bounds = array<i64: 1, 32>}, {transform_indices = @transform_5, window_bounds = array<i64: 8, 32>}, {transform_indices = @transform_6, window_bounds = array<i64: 8, 8>}]} {
    %cst = arith.constant 0.000000e+00 : f32
    %0 = vector.broadcast %cst : f32 to vector<8x8xf32>
    %c0 = arith.constant 0 : index
    %c0_0 = arith.constant 0 : index
    %c0_1 = arith.constant 0 : index
    %1 = vector.load %arg1[%c0, %c0_0, %c0_1] : memref<2x8x32xbf16, #tpu.memory_space<vmem>>, vector<1x8x32xbf16>
    %2 = vector.shape_cast %1 : vector<1x8x32xbf16> to vector<8x32xbf16>
    %c0_2 = arith.constant 0 : index
    %c0_3 = arith.constant 0 : index
    %c0_4 = arith.constant 0 : index
    %3 = vector.load %arg2[%c0_2, %c0_3, %c0_4] : memref<2x8x32xbf16, #tpu.memory_space<vmem>>, vector<1x8x32xbf16>
    %4 = vector.shape_cast %3 : vector<1x8x32xbf16> to vector<8x32xbf16>
    %c0_5 = arith.constant 0 : index
    %c0_6 = arith.constant 0 : index
    %c0_7 = arith.constant 0 : index
    %5 = vector.load %arg3[%c0_5, %c0_6, %c0_7] : memref<2x8x32xbf16, #tpu.memory_space<vmem>>, vector<1x8x32xbf16>
    %6 = vector.shape_cast %5 : vector<1x8x32xbf16> to vector<8x32xbf16>
    %cst_8 = arith.constant dense<0.000000e+00> : vector<8x8xf32>
    %7 = tpu.matmul %2, %4, %cst_8 {dimension_numbers = #tpu.dot_dimension_numbers<[1], [1], [0], [0], [0, 0, 1, 0], [], []>} : vector<8x32xbf16>, vector<8x32xbf16>, vector<8x8xf32> -> vector<8x8xf32>
    %cst_9 = arith.constant dense<0xFF800000> : vector<8xf32>
    %8 = vector.multi_reduction <maximumf>, %7, %cst_9 [1] : vector<8x8xf32> to vector<8xf32>
    %9 = vector.shape_cast %8 : vector<8xf32> to vector<8x1xf32>
    %10 = vector.broadcast %9 : vector<8x1xf32> to vector<8x8xf32>
    %11 = arith.subf %7, %10 : vector<8x8xf32>
    %12 = math.exp %11 : vector<8x8xf32>
    %cst_10 = arith.constant dense<0.000000e+00> : vector<8xf32>
    %13 = vector.multi_reduction <add>, %12, %cst_10 [1] : vector<8x8xf32> to vector<8xf32>
    %14 = vector.shape_cast %13 : vector<8xf32> to vector<8x1xf32>
    %15 = tpu.reciprocal %14 {approx = true} : vector<8x1xf32> -> vector<8x1xf32>
    %cst_11 = arith.constant 5.000000e-01 : f32
    %16 = vector.broadcast %cst_11 : f32 to vector<8x1xf32>
    %17 = arith.mulf %15, %16 : vector<8x1xf32>
    %18 = vector.broadcast %17 : vector<8x1xf32> to vector<8x8xf32>
    %19 = arith.mulf %12, %18 : vector<8x8xf32>
    %20 = arith.addf %0, %19 : vector<8x8xf32>
    %21 = arith.truncf %12 : vector<8x8xf32> to vector<8x8xbf16>
    %cst_12 = arith.constant dense<0.000000e+00> : vector<8x32xf32>
    %22 = tpu.matmul %21, %6, %cst_12 {dimension_numbers = #tpu.dot_dimension_numbers<[1], [0], [0], [1], [0, 0, 1, 1], [], []>} : vector<8x8xbf16>, vector<8x32xbf16>, vector<8x32xf32> -> vector<8x32xf32>
    %23 = vector.broadcast %15 : vector<8x1xf32> to vector<8x32xf32>
    %24 = arith.mulf %22, %23 : vector<8x32xf32>
    %25 = arith.truncf %24 : vector<8x32xf32> to vector<8x32xbf16>
    %c0_13 = arith.constant 0 : index
    %c0_14 = arith.constant 0 : index
    %26 = vector.load %arg8[%c0_13, %c0_14] : memref<8x64xbf16, #tpu.memory_space<vmem>>, vector<8x32xbf16>
    tpu.vector_store %arg8[%c0_13, %c0_14], %25 {strides = array<i32>} : memref<8x64xbf16, #tpu.memory_space<vmem>>, vector<8x32xbf16>,
    %c1 = arith.constant 1 : index
    %c0_15 = arith.constant 0 : index
    %c0_16 = arith.constant 0 : index
    %27 = vector.load %arg1[%c1, %c0_15, %c0_16] : memref<2x8x32xbf16, #tpu.memory_space<vmem>>, vector<1x8x32xbf16>
    %28 = vector.shape_cast %27 : vector<1x8x32xbf16> to vector<8x32xbf16>
    %c1_17 = arith.constant 1 : index
    %c0_18 = arith.constant 0 : index
    %c0_19 = arith.constant 0 : index
    %29 = vector.load %arg2[%c1_17, %c0_18, %c0_19] : memref<2x8x32xbf16, #tpu.memory_space<vmem>>, vector<1x8x32xbf16>
    %30 = vector.shape_cast %29 : vector<1x8x32xbf16> to vector<8x32xbf16>
    %c1_20 = arith.constant 1 : index
    %c0_21 = arith.constant 0 : index
    %c0_22 = arith.constant 0 : index
    %31 = vector.load %arg3[%c1_20, %c0_21, %c0_22] : memref<2x8x32xbf16, #tpu.memory_space<vmem>>, vector<1x8x32xbf16>
    %32 = vector.shape_cast %31 : vector<1x8x32xbf16> to vector<8x32xbf16>
    %cst_23 = arith.constant dense<0.000000e+00> : vector<8x8xf32>
    %33 = tpu.matmul %28, %30, %cst_23 {dimension_numbers = #tpu.dot_dimension_numbers<[1], [1], [0], [0], [0, 0, 1, 0], [], []>} : vector<8x32xbf16>, vector<8x32xbf16>, vector<8x8xf32> -> vector<8x8xf32>
    %cst_24 = arith.constant dense<0xFF800000> : vector<8xf32>
    %34 = vector.multi_reduction <maximumf>, %33, %cst_24 [1] : vector<8x8xf32> to vector<8xf32>
    %35 = vector.shape_cast %34 : vector<8xf32> to vector<8x1xf32>
    %36 = vector.broadcast %35 : vector<8x1xf32> to vector<8x8xf32>
    %37 = arith.subf %33, %36 : vector<8x8xf32>
    %38 = math.exp %37 : vector<8x8xf32>
    %cst_25 = arith.constant dense<0.000000e+00> : vector<8xf32>
    %39 = vector.multi_reduction <add>, %38, %cst_25 [1] : vector<8x8xf32> to vector<8xf32>
    %40 = vector.shape_cast %39 : vector<8xf32> to vector<8x1xf32>
    %41 = tpu.reciprocal %40 {approx = true} : vector<8x1xf32> -> vector<8x1xf32>
    %cst_26 = arith.constant 5.000000e-01 : f32
    %42 = vector.broadcast %cst_26 : f32 to vector<8x1xf32>
    %43 = arith.mulf %41, %42 : vector<8x1xf32>
    %44 = vector.broadcast %43 : vector<8x1xf32> to vector<8x8xf32>
    %45 = arith.mulf %38, %44 : vector<8x8xf32>
    %46 = arith.addf %20, %45 : vector<8x8xf32>
    %47 = arith.truncf %38 : vector<8x8xf32> to vector<8x8xbf16>
    %cst_27 = arith.constant dense<0.000000e+00> : vector<8x32xf32>
    %48 = tpu.matmul %47, %32, %cst_27 {dimension_numbers = #tpu.dot_dimension_numbers<[1], [0], [0], [1], [0, 0, 1, 1], [], []>} : vector<8x8xbf16>, vector<8x32xbf16>, vector<8x32xf32> -> vector<8x32xf32>
    %49 = vector.broadcast %41 : vector<8x1xf32> to vector<8x32xf32>
    %50 = arith.mulf %48, %49 : vector<8x32xf32>
    %51 = arith.truncf %50 : vector<8x32xf32> to vector<8x32xbf16>
    %c0_28 = arith.constant 0 : index
    %c32 = arith.constant 32 : index
    %52 = vector.load %arg8[%c0_28, %c32] : memref<8x64xbf16, #tpu.memory_space<vmem>>, vector<8x32xbf16>
    tpu.vector_store %arg8[%c0_28, %c32], %51 {strides = array<i32>} : memref<8x64xbf16, #tpu.memory_space<vmem>>, vector<8x32xbf16>,
    %c0_29 = arith.constant 0 : index
    %c0_30 = arith.constant 0 : index
    %53 = vector.load %arg7[%c0_29, %c0_30] : memref<8x8xf32, #tpu.memory_space<vmem>>, vector<8x8xf32>
    tpu.vector_store %arg7[%c0_29, %c0_30], %46 {strides = array<i32>} : memref<8x8xf32, #tpu.memory_space<vmem>>, vector<8x8xf32>,
    %c0_31 = arith.constant 0 : index
    %c0_32 = arith.constant 0 : index
    %54 = vector.load %arg8[%c0_31, %c0_32] : memref<8x64xbf16, #tpu.memory_space<vmem>>, vector<8x64xbf16>
    %c0_33 = arith.constant 0 : index
    %c0_34 = arith.constant 0 : index
    %55 = vector.load %arg4[%c0_33, %c0_34] : memref<64x32xbf16, #tpu.memory_space<vmem>>, vector<64x32xbf16>
    %cst_35 = arith.constant dense<0.000000e+00> : vector<8x32xf32>
    %56 = tpu.matmul %54, %55, %cst_35 {dimension_numbers = #tpu.dot_dimension_numbers<[1], [0], [0], [1], [0, 0, 1, 1], [], []>} : vector<8x64xbf16>, vector<64x32xbf16>, vector<8x32xf32> -> vector<8x32xf32>
    %c0_36 = arith.constant 0 : index
    %c0_37 = arith.constant 0 : index
    %57 = vector.load %arg5[%c0_36, %c0_37] : memref<1x32xf32, #tpu.memory_space<vmem>>, vector<1x32xf32>
    %58 = vector.broadcast %57 : vector<1x32xf32> to vector<8x32xf32>
    %59 = arith.addf %56, %58 : vector<8x32xf32>
    %c0_38 = arith.constant 0 : index
    %c0_39 = arith.constant 0 : index
    %60 = vector.load %arg6[%c0_38, %c0_39] : memref<8x32xf32, #tpu.memory_space<vmem>>, vector<8x32xf32>
    tpu.vector_store %arg6[%c0_38, %c0_39], %59 {strides = array<i32>} : memref<8x32xf32, #tpu.memory_space<vmem>>, vector<8x32xf32>,
    return
  }
  func.func @transform_0(%arg0: i32) -> (i32, i32, i32) {
    %c0_i32 = arith.constant 0 : i32
    %c0_i32_0 = arith.constant 0 : i32
    %c0_i32_1 = arith.constant 0 : i32
    return %c0_i32, %arg0, %c0_i32_0 : i32, i32, i32
  }
  func.func @transform_1(%arg0: i32) -> (i32, i32, i32) {
    %c0_i32 = arith.constant 0 : i32
    %c0_i32_0 = arith.constant 0 : i32
    %c0_i32_1 = arith.constant 0 : i32
    %c0_i32_2 = arith.constant 0 : i32
    return %c0_i32, %c0_i32_0, %c0_i32_1 : i32, i32, i32
  }
  func.func @transform_2(%arg0: i32) -> (i32, i32, i32) {
    %c0_i32 = arith.constant 0 : i32
    %c0_i32_0 = arith.constant 0 : i32
    %c0_i32_1 = arith.constant 0 : i32
    %c0_i32_2 = arith.constant 0 : i32
    return %c0_i32, %c0_i32_0, %c0_i32_1 : i32, i32, i32
  }
  func.func @transform_3(%arg0: i32) -> (i32, i32) {
    %c0_i32 = arith.constant 0 : i32
    %c0_i32_0 = arith.constant 0 : i32
    %c0_i32_1 = arith.constant 0 : i32
    return %c0_i32, %c0_i32_0 : i32, i32
  }
  func.func @transform_4(%arg0: i32) -> (i32, i32) {
    %c0_i32 = arith.constant 0 : i32
    %c0_i32_0 = arith.constant 0 : i32
    %c0_i32_1 = arith.constant 0 : i32
    return %c0_i32, %c0_i32_0 : i32, i32
  }
  func.func @transform_5(%arg0: i32) -> (i32, i32) {
    %c0_i32 = arith.constant 0 : i32
    %c0_i32_0 = arith.constant 0 : i32
    return %arg0, %c0_i32 : i32, i32
  }
  func.func @transform_6(%arg0: i32) -> (i32, i32) {
    %c0_i32 = arith.constant 0 : i32
    %c0_i32_0 = arith.constant 0 : i32
    return %arg0, %c0_i32 : i32, i32
  }
}

</mosaic_0001>

<llo_original>
// kernel: multi_head_attn.2
$region0: #{multi_head_attn.2}
  #allocation0 [shape = 'u32[]', space=smem, size = 0x4, offset = 0x4, fixed_abs, tag = 'smem constant byte address 0x4 - core index']
  #allocation1 [shape = 'u32[144,128]{1,0:T(1,128)}', space=vmem, size = 0x12000, scoped, tag = 'internal scratch']
  %s0 = inlined_call_operand.vmem [shape: bf16[8,32], index: 0, kind: input, shape index: {}]
  %s1 = inlined_call_operand.vmem [shape: bf16[32,192], index: 1, kind: input, shape index: {}]
  %s2 = inlined_call_operand.vmem [shape: f32[1,192], index: 2, kind: input, shape index: {}]
  %s3 = inlined_call_operand.vmem [shape: bf16[2,8,32], index: 3, kind: output, shape index: {0}]
  %s4 = inlined_call_operand.vmem [shape: bf16[2,8,32], index: 4, kind: output, shape index: {1}]
  %s5 = inlined_call_operand.vmem [shape: bf16[2,8,32], index: 5, kind: output, shape index: {2}]
  %6 = xla_tuple %s3, %s4, %s5
  %s7 = sld [smem:[#allocation0]]
  $region38: #{multi_head_attn.2} parent=0
    _
  %s9 = ssub.s32 1, %s7
  %s10 = scalar_select 0, %s9, %s7
  // Predicated region
  $region2: #{multi_head_attn.2} parent=0 // pred_check
    _
  $region3: #{multi_head_attn.2} parent=0 // pred_check_branch
    %12 = sbr.rel (0) target = $region5
  $region4: #{multi_head_attn.2} parent=0 // pred_region
    _
  $region5: #{multi_head_attn.2} parent=0 // pred_fallthru
    _
  // Predicated region
  $region6: #{multi_head_attn.2} parent=0 // pred_check
    _
  $region7: #{multi_head_attn.2} parent=0 // pred_check_branch
    %14 = sbr.rel (0) target = $region9
  $region8: #{multi_head_attn.2} parent=0 // pred_region
    _
  $region9: #{multi_head_attn.2} parent=0 // pred_fallthru
    _
  // Predicated region
  $region10: #{multi_head_attn.2} parent=0 // pred_check
    _
  $region11: #{multi_head_attn.2} parent=0 // pred_check_branch
    %16 = sbr.rel (0) target = $region13
  $region12: #{multi_head_attn.2} parent=0 // pred_region
    _
  $region13: #{multi_head_attn.2} parent=0 // pred_fallthru
    _
  %v18 = vld [vmem:[%s0] sm:$0xf]
  %v19 = vld [vmem:[%s1] sm:$0xff]
  %v20 = vld [vmem:[%s1 + $0x8] sm:$0xff]
  %v21 = vld [vmem:[%s1 + $0x10] sm:$0xff]
  %v22 = vld [vmem:[%s1 + $0x18] sm:$0xff]
  %v23 = vld [vmem:[%s2] sm:$0x3]
  %v25 = vlaneseq
  %v26 = vshrl.u32 %v25, 7
  %v27 = vsub.s32 0, %v26
  %v28 = vrot.slane %v23, %v27
  %v29 = vlaneseq
  %v30 = vshrl.u32 %v29, 7
  %v31 = vsub.s32 1, %v30
  %v32 = vrot.slane %v23, %v31
  %v39 = vunpack.c.l.b16 %v19
  %v40 = vunpack.c.h.b16 %v19
  %v41 = vunpack.c.l.b16 %v20
  %v42 = vunpack.c.h.b16 %v20
  %v43 = vunpack.c.l.b16 %v21
  %v44 = vunpack.c.h.b16 %v21
  %v45 = vunpack.c.l.b16 %v22
  %v46 = vunpack.c.h.b16 %v22
  %v47 = vpack.c.b16 %v41, %v39
  %v48 = vpack.c.b16 %v42, %v40
  %v49 = vpack.c.b16 %v45, %v43
  %v50 = vpack.c.b16 %v46, %v44
  %vm55 = vcmask 261120
  %v57 = vsel %vm55, %v18, 0
  %59 = vmatprep.subr.bf16.mxu0 0
  %60 = vmatpush1.bf16.msra.mxu0 0
  %61 = vmatprep.subr.bf16.mxu0 0
  %62 = vmatpush1.bf16.msra.mxu0 0
  %63 = vmatprep.subr.bf16.mxu0 0
  %64 = vmatpush1.bf16.msra.mxu0 0
  %65 = vmatprep.subr.bf16.mxu0 0
  %66 = vmatpush1.bf16.msra.mxu0 0
  %67 = vmatprep.subr.bf16.mxu0 0
  %68 = vmatpush1.bf16.msra.mxu0 0
  %69 = vmatprep.subr.bf16.mxu0 0
  %70 = vmatpush1.bf16.msra.mxu0 0
  %71 = vmatprep.subr.bf16.mxu0 %v50
  %72 = vmatpush1.bf16.msra.mxu0 %v49
  %73 = vmatprep.subr.bf16.mxu0 %v48
  %74 = vmatpush1.bf16.msra.mxu0 %v47
  %75 = vmatprep.subr.bf16.mxu0 0
  %76 = vmatpush2.bf16.msra.mxu0 0
  %77 = vmatprep.subr.bf16.mxu0 0
  %78 = vmatpush2.bf16.msra.mxu0 0
  %79 = vmatprep.subr.bf16.mxu0 0
  %80 = vmatpush2.bf16.msra.mxu0 0
  %81 = vmatprep.subr.bf16.mxu0 0
  %82 = vmatpush2.bf16.msra.mxu0 0
  %83 = vmatprep.subr.bf16.mxu0 0
  %84 = vmatpush2.bf16.msra.mxu0 0
  %85 = vmatprep.subr.bf16.mxu0 0
  %86 = vmatpush2.bf16.msra.mxu0 0
  %87 = vmatprep.subr.bf16.mxu0 0
  %88 = vmatpush2.bf16.msra.mxu0 0
  %89 = vmatprep.subr.bf16.mxu0 0
  %90 = vmatpush2.bf16.msra.mxu0 0
  %91 = vmatprep.mubr.bf16.mxu0 0
  %92 = vmatmul.mubr.bf16.gmra.mxu0 %v57
  %v93 = vpop.f32.mrf.mxu0
  %v94 = vadd.f32 %v28, %v93
  %v95 = vpop.f32.mrf.mxu0
  %v96 = vadd.f32 %v32, %v95
  %v97 = vpop.f32.mrf.mxu0
  %v98 = vpop.f32.mrf.mxu0
  %99 = vdwg.mxu0
  %v100 = vpack.c.bf16 %v94, %v94
  %vm101 = vcmask 257024
  %102 = vst.msk [vmem:[%s3] sm:$0xf] %vm101, %v100
  %v104 = vunpack.c.l.b16 %v100
  %v105 = vpack.c.b16 %v104, %v104
  %106 = vrot.lane.b32.xlu0 %v105, 96
  %v107 = vpop.permute.xlu0 %106
  %s109 = scalar_lea.vmem %s3, 4
  %110 = vst.msk [vmem:[%s109] sm:$0xf] %vm101, %v107
  %111 = vrot.lane.b32.xlu0 %v105, 64
  %v112 = vpop.permute.xlu0 %111
  %114 = vst.msk [vmem:[%s4] sm:$0xf] %vm101, %v112
  %115 = vrot.lane.b32.xlu0 %v105, 32
  %v116 = vpop.permute.xlu0 %115
  %s118 = scalar_lea.vmem %s4, 4
  %119 = vst.msk [vmem:[%s118] sm:$0xf] %vm101, %v116
  %v120 = vpack.c.bf16 %v96, %v96
  %121 = vst.msk [vmem:[%s5] sm:$0xf] %vm101, %v120
  %v123 = vunpack.c.l.b16 %v120
  %v124 = vpack.c.b16 %v123, %v123
  %125 = vrot.lane.b32.xlu0 %v124, 96
  %v126 = vpop.permute.xlu0 %125
  %s128 = scalar_lea.vmem %s5, 4
  %129 = vst.msk [vmem:[%s128] sm:$0xf] %vm101, %v126
  // Predicated region
  $region14: #{multi_head_attn.2} parent=0 // pred_check
    _
  $region15: #{multi_head_attn.2} parent=0 // pred_check_branch
    %131 = sbr.rel (0) target = $region17
  $region16: #{multi_head_attn.2} parent=0 // pred_region
    _
  $region17: #{multi_head_attn.2} parent=0 // pred_fallthru
    _
  // Predicated region
  $region18: #{multi_head_attn.2} parent=0 // pred_check
    _
  $region19: #{multi_head_attn.2} parent=0 // pred_check_branch
    %133 = sbr.rel (0) target = $region21
  $region20: #{multi_head_attn.2} parent=0 // pred_region
    _
  $region21: #{multi_head_attn.2} parent=0 // pred_fallthru
    _
  // Predicated region
  $region22: #{multi_head_attn.2} parent=0 // pred_check
    _
  $region23: #{multi_head_attn.2} parent=0 // pred_check_branch
    %135 = sbr.rel (0) target = $region25
  $region24: #{multi_head_attn.2} parent=0 // pred_region
    _
  $region25: #{multi_head_attn.2} parent=0 // pred_fallthru
    _
  // Predicated region
  $region26: #{multi_head_attn.2} parent=0 // pred_check
    _
  $region27: #{multi_head_attn.2} parent=0 // pred_check_branch
    %137 = sbr.rel (0) target = $region29
  $region28: #{multi_head_attn.2} parent=0 // pred_region
    _
  $region29: #{multi_head_attn.2} parent=0 // pred_fallthru
    _
  // Predicated region
  $region30: #{multi_head_attn.2} parent=0 // pred_check
    _
  $region31: #{multi_head_attn.2} parent=0 // pred_check_branch
    %139 = sbr.rel (0) target = $region33
  $region32: #{multi_head_attn.2} parent=0 // pred_region
    _
  $region33: #{multi_head_attn.2} parent=0 // pred_fallthru
    _
  // Predicated region
  $region34: #{multi_head_attn.2} parent=0 // pred_check
    _
  $region35: #{multi_head_attn.2} parent=0 // pred_check_branch
    %141 = sbr.rel (0) target = $region37
  $region36: #{multi_head_attn.2} parent=0 // pred_region
    _
  $region37: #{multi_head_attn.2} parent=0 // pred_fallthru
    _

// kernel: multi_head_attn.3
$region0: #{multi_head_attn.3}
  #allocation0 [shape = 'u32[]', space=smem, size = 0x4, offset = 0x4, fixed_abs, tag = 'smem constant byte address 0x4 - core index']
  #allocation1 [shape = 'u32[144,128]{1,0:T(1,128)}', space=vmem, size = 0x12000, scoped, tag = 'internal scratch']
  #allocation2 [shape = 'bf16[8,64]{1,0:T(8,128)(2,1)}', space=vmem, size = 0x800, scoped, tag = 'scratch operand']
  %s0 = inlined_call_operand.vmem [shape: bf16[2,8,32], index: 0, kind: input, shape index: {}]
  %s1 = inlined_call_operand.vmem [shape: bf16[2,8,32], index: 1, kind: input, shape index: {}]
  %s2 = inlined_call_operand.vmem [shape: bf16[2,8,32], index: 2, kind: input, shape index: {}]
  %s3 = inlined_call_operand.vmem [shape: bf16[64,32], index: 3, kind: input, shape index: {}]
  %s4 = inlined_call_operand.vmem [shape: f32[1,32], index: 4, kind: input, shape index: {}]
  %s5 = inlined_call_operand.hbm [shape: f32[8,32], index: 5, kind: output, shape index: {0}]
  %s6 = inlined_call_operand.hbm [shape: f32[8,8], index: 6, kind: output, shape index: {1}]
  %7 = xla_tuple %s5, %s6
  %s8 = sld [smem:[#allocation0]]
  $region38: #{multi_head_attn.3} parent=0
    _
  %s10 = ssub.s32 1, %s8
  %s11 = scalar_select 0, %s10, %s8
  $region1: #{multi_head_attn.3} parent=0
    #allocation3 [shape = 'u8[4096]{0}', space=vmem, size = 0x1000, scoped, tag = 'output window, operand 0, single buffered']
    #allocation4 [shape = 's32[1]{0}', space=sflag, size = 0x4, scoped, tag = 'scoped memory for multi_head_attn.3']
    #allocation5 [shape = 'u8[4096]{0}', space=vmem, size = 0x1000, scoped, tag = 'output window, operand 1, single buffered']
    #allocation6 [shape = 's32[1]{0}', space=sflag, size = 0x4, scoped, tag = 'scoped memory for multi_head_attn.3']
    %12 = vsyncpa [#allocation4], 0
    %13 = vsyncpa [#allocation6], 0
    // Predicated region
    $region2: #{multi_head_attn.3} parent=1 // pred_check
      _
    $region3: #{multi_head_attn.3} parent=1 // pred_check_branch
      %15 = sbr.rel (0) target = $region5
    $region4: #{multi_head_attn.3} parent=1 // pred_region
      _
    $region5: #{multi_head_attn.3} parent=1 // pred_fallthru
      _
    // Predicated region
    $region6: #{multi_head_attn.3} parent=1 // pred_check
      _
    $region7: #{multi_head_attn.3} parent=1 // pred_check_branch
      %17 = sbr.rel (0) target = $region9
    $region8: #{multi_head_attn.3} parent=1 // pred_region
      _
    $region9: #{multi_head_attn.3} parent=1 // pred_fallthru
      _
    // Predicated region
    $region10: #{multi_head_attn.3} parent=1 // pred_check
      _
    $region11: #{multi_head_attn.3} parent=1 // pred_check_branch
      %19 = sbr.rel (0) target = $region13
    $region12: #{multi_head_attn.3} parent=1 // pred_region
      _
    $region13: #{multi_head_attn.3} parent=1 // pred_fallthru
      _
    // Predicated region
    $region14: #{multi_head_attn.3} parent=1 // pred_check
      _
    $region15: #{multi_head_attn.3} parent=1 // pred_check_branch
      %21 = sbr.rel (0) target = $region17
    $region16: #{multi_head_attn.3} parent=1 // pred_region
      _
    $region17: #{multi_head_attn.3} parent=1 // pred_fallthru
      _
    // Predicated region
    $region18: #{multi_head_attn.3} parent=1 // pred_check
      _
    $region19: #{multi_head_attn.3} parent=1 // pred_check_branch
      %23 = sbr.rel (0) target = $region21
    $region20: #{multi_head_attn.3} parent=1 // pred_region
      _
    $region21: #{multi_head_attn.3} parent=1 // pred_fallthru
      _
    %v25 = vld [vmem:[%s0] sm:$0xf]
    %v26 = vld [vmem:[%s1] sm:$0xf]
    %v27 = vld [vmem:[%s2] sm:$0xf]
    %vm28 = vcmask 261120
    %v30 = vsel %vm28, %v25, 0
    %v33 = vsel %vm28, %v26, 0
    %35 = vmatprep.subr.bf16.mxu0 0
    %36 = vmatpush1.bf16.xpose.msra.mxu0 0
    %37 = vmatprep.subr.bf16.mxu0 0
    %38 = vmatpush1.bf16.xpose.msra.mxu0 0
    %39 = vmatprep.subr.bf16.mxu0 0
    %40 = vmatpush1.bf16.xpose.msra.mxu0 0
    %41 = vmatprep.subr.bf16.mxu0 0
    %42 = vmatpush1.bf16.xpose.msra.mxu0 0
    %43 = vmatprep.subr.bf16.mxu0 0
    %44 = vmatpush1.bf16.xpose.msra.mxu0 0
    %45 = vmatprep.subr.bf16.mxu0 0
    %46 = vmatpush1.bf16.xpose.msra.mxu0 0
    %47 = vmatprep.subr.bf16.mxu0 0
    %48 = vmatpush1.bf16.xpose.msra.mxu0 0
    %49 = vmatprep.subr.bf16.mxu0 0
    %50 = vmatpush1.bf16.xpose.msra.mxu0 %v33
    %51 = vmatprep.subr.bf16.mxu0 0
    %52 = vmatpush2.bf16.xpose.msra.mxu0 0
    %53 = vmatprep.subr.bf16.mxu0 0
    %54 = vmatpush2.bf16.xpose.msra.mxu0 0
    %55 = vmatprep.subr.bf16.mxu0 0
    %56 = vmatpush2.bf16.xpose.msra.mxu0 0
    %57 = vmatprep.subr.bf16.mxu0 0
    %58 = vmatpush2.bf16.xpose.msra.mxu0 0
    %59 = vmatprep.subr.bf16.mxu0 0
    %60 = vmatpush2.bf16.xpose.msra.mxu0 0
    %61 = vmatprep.subr.bf16.mxu0 0
    %62 = vmatpush2.bf16.xpose.msra.mxu0 0
    %63 = vmatprep.subr.bf16.mxu0 0
    %64 = vmatpush2.bf16.xpose.msra.mxu0 0
    %65 = vmatprep.subr.bf16.mxu0 0
    %66 = vmatpush2.bf16.xpose.msra.mxu0 0
    %67 = vmatprep.mubr.bf16.mxu0 0
    %68 = vmatmul.mubr.bf16.gmra.mxu0 %v30
    %v69 = vpop.f32.mrf.mxu0
    %v70 = vadd.f32 0.0, %v69
    %v71 = vpop.f32.mrf.mxu0
    %v72 = vpop.f32.mrf.mxu0
    %v73 = vpop.f32.mrf.mxu0
    %74 = vdwg.mxu0
    %vm75 = vcmask 64512
    %v76 = vsel %vm75, %v70, -inf
    %77 = vmax.xlane.f32.xlu0 %v76
    %v78 = vpop.xlane.xlu0 %77
    %v79 = vsub.f32 %v70, %v78
    %v80 = vmul.f32 %v79, 1.442695
    %v81 = vpow.pop %v80
    %v82 = vsel %vm75, %v81, 0.0
    %83 = vadd.xlane.f32.xlu0 %v82
    %v84 = vpop.xlane.xlu0 %83
    %v85 = vrcp.pop %v84
    %v86 = vmul.f32 %v85, 0.5
    %v87 = vmul.f32 %v81, %v86
    %v88 = vadd.f32 %v87, 0.0
    %v89 = vpack.c.bf16 %v81, %v81
    %v91 = vsel %vm75, %v89, 0
    %vm93 = vcmask 1043456
    %v95 = vsel %vm93, %v27, 0
    %97 = vmatprep.subr.bf16.mxu0 0
    %98 = vmatpush1.bf16.msra.mxu0 0
    %99 = vmatprep.subr.bf16.mxu0 0
    %100 = vmatpush1.bf16.msra.mxu0 0
    %101 = vmatprep.subr.bf16.mxu0 0
    %102 = vmatpush1.bf16.msra.mxu0 0
    %103 = vmatprep.subr.bf16.mxu0 0
    %104 = vmatpush1.bf16.msra.mxu0 0
    %105 = vmatprep.subr.bf16.mxu0 0
    %106 = vmatpush1.bf16.msra.mxu0 0
    %107 = vmatprep.subr.bf16.mxu0 0
    %108 = vmatpush1.bf16.msra.mxu0 0
    %109 = vmatprep.subr.bf16.mxu0 0
    %110 = vmatpush1.bf16.msra.mxu0 0
    %111 = vmatprep.subr.bf16.mxu0 0
    %112 = vmatpush1.bf16.msra.mxu0 %v95
    %113 = vmatprep.subr.bf16.mxu0 0
    %114 = vmatpush2.bf16.msra.mxu0 0
    %115 = vmatprep.subr.bf16.mxu0 0
    %116 = vmatpush2.bf16.msra.mxu0 0
    %117 = vmatprep.subr.bf16.mxu0 0
    %118 = vmatpush2.bf16.msra.mxu0 0
    %119 = vmatprep.subr.bf16.mxu0 0
    %120 = vmatpush2.bf16.msra.mxu0 0
    %121 = vmatprep.subr.bf16.mxu0 0
    %122 = vmatpush2.bf16.msra.mxu0 0
    %123 = vmatprep.subr.bf16.mxu0 0
    %124 = vmatpush2.bf16.msra.mxu0 0
    %125 = vmatprep.subr.bf16.mxu0 0
    %126 = vmatpush2.bf16.msra.mxu0 0
    %127 = vmatprep.subr.bf16.mxu0 0
    %128 = vmatpush2.bf16.msra.mxu0 0
    %129 = vmatprep.mubr.bf16.mxu0 0
    %130 = vmatmul.mubr.bf16.gmra.mxu0 %v91
    %v131 = vpop.f32.mrf.mxu0
    %v132 = vadd.f32 0.0, %v131
    %v133 = vpop.f32.mrf.mxu0
    %v134 = vpop.f32.mrf.mxu0
    %v135 = vpop.f32.mrf.mxu0
    %136 = vdwg.mxu0
    %v137 = vmul.f32 %v132, %v85
    %v138 = vpack.c.bf16 %v137, %v137
    %vm139 = vcmask 257024
    %140 = vst.msk [vmem:[#allocation2] sm:$0xf] %vm139, %v138
    %s141 = scalar_lea.vmem %s0, 4
    %v142 = vld [vmem:[%s141] sm:$0xf]
    %s143 = scalar_lea.vmem %s1, 4
    %v144 = vld [vmem:[%s143] sm:$0xf]
    %s145 = scalar_lea.vmem %s2, 4
    %v146 = vld [vmem:[%s145] sm:$0xf]
    %v148 = vsel %vm28, %v142, 0
    %v151 = vsel %vm28, %v144, 0
    %153 = vmatprep.subr.bf16.mxu0 0
    %154 = vmatpush1.bf16.xpose.msra.mxu0 0
    %155 = vmatprep.subr.bf16.mxu0 0
    %156 = vmatpush1.bf16.xpose.msra.mxu0 0
    %157 = vmatprep.subr.bf16.mxu0 0
    %158 = vmatpush1.bf16.xpose.msra.mxu0 0
    %159 = vmatprep.subr.bf16.mxu0 0
    %160 = vmatpush1.bf16.xpose.msra.mxu0 0
    %161 = vmatprep.subr.bf16.mxu0 0
    %162 = vmatpush1.bf16.xpose.msra.mxu0 0
    %163 = vmatprep.subr.bf16.mxu0 0
    %164 = vmatpush1.bf16.xpose.msra.mxu0 0
    %165 = vmatprep.subr.bf16.mxu0 0
    %166 = vmatpush1.bf16.xpose.msra.mxu0 0
    %167 = vmatprep.subr.bf16.mxu0 0
    %168 = vmatpush1.bf16.xpose.msra.mxu0 %v151
    %169 = vmatprep.subr.bf16.mxu0 0
    %170 = vmatpush2.bf16.xpose.msra.mxu0 0
    %171 = vmatprep.subr.bf16.mxu0 0
    %172 = vmatpush2.bf16.xpose.msra.mxu0 0
    %173 = vmatprep.subr.bf16.mxu0 0
    %174 = vmatpush2.bf16.xpose.msra.mxu0 0
    %175 = vmatprep.subr.bf16.mxu0 0
    %176 = vmatpush2.bf16.xpose.msra.mxu0 0
    %177 = vmatprep.subr.bf16.mxu0 0
    %178 = vmatpush2.bf16.xpose.msra.mxu0 0
    %179 = vmatprep.subr.bf16.mxu0 0
    %180 = vmatpush2.bf16.xpose.msra.mxu0 0
    %181 = vmatprep.subr.bf16.mxu0 0
    %182 = vmatpush2.bf16.xpose.msra.mxu0 0
    %183 = vmatprep.subr.bf16.mxu0 0
    %184 = vmatpush2.bf16.xpose.msra.mxu0 0
    %185 = vmatprep.mubr.bf16.mxu0 0
    %186 = vmatmul.mubr.bf16.gmra.mxu0 %v148
    %v187 = vpop.f32.mrf.mxu0
    %v188 = vadd.f32 0.0, %v187
    %v189 = vpop.f32.mrf.mxu0
    %v190 = vpop.f32.mrf.mxu0
    %v191 = vpop.f32.mrf.mxu0
    %192 = vdwg.mxu0
    %v193 = vsel %vm75, %v188, -inf
    %194 = vmax.xlane.f32.xlu0 %v193
    %v195 = vpop.xlane.xlu0 %194
    %v196 = vsub.f32 %v188, %v195
    %v197 = vmul.f32 %v196, 1.442695
    %v198 = vpow.pop %v197
    %v199 = vsel %vm75, %v198, 0.0
    %200 = vadd.xlane.f32.xlu0 %v199
    %v201 = vpop.xlane.xlu0 %200
    %v202 = vrcp.pop %v201
    %v203 = vmul.f32 %v202, 0.5
    %v204 = vmul.f32 %v198, %v203
    %v205 = vadd.f32 %v88, %v204
    %v206 = vpack.c.bf16 %v198, %v198
    %v208 = vsel %vm75, %v206, 0
    %v211 = vsel %vm93, %v146, 0
    %213 = vmatprep.subr.bf16.mxu0 0
    %214 = vmatpush1.bf16.msra.mxu0 0
    %215 = vmatprep.subr.bf16.mxu0 0
    %216 = vmatpush1.bf16.msra.mxu0 0
    %217 = vmatprep.subr.bf16.mxu0 0
    %218 = vmatpush1.bf16.msra.mxu0 0
    %219 = vmatprep.subr.bf16.mxu0 0
    %220 = vmatpush1.bf16.msra.mxu0 0
    %221 = vmatprep.subr.bf16.mxu0 0
    %222 = vmatpush1.bf16.msra.mxu0 0
    %223 = vmatprep.subr.bf16.mxu0 0
    %224 = vmatpush1.bf16.msra.mxu0 0
    %225 = vmatprep.subr.bf16.mxu0 0
    %226 = vmatpush1.bf16.msra.mxu0 0
    %227 = vmatprep.subr.bf16.mxu0 0
    %228 = vmatpush1.bf16.msra.mxu0 %v211
    %229 = vmatprep.subr.bf16.mxu0 0
    %230 = vmatpush2.bf16.msra.mxu0 0
    %231 = vmatprep.subr.bf16.mxu0 0
    %232 = vmatpush2.bf16.msra.mxu0 0
    %233 = vmatprep.subr.bf16.mxu0 0
    %234 = vmatpush2.bf16.msra.mxu0 0
    %235 = vmatprep.subr.bf16.mxu0 0
    %236 = vmatpush2.bf16.msra.mxu0 0
    %237 = vmatprep.subr.bf16.mxu0 0
    %238 = vmatpush2.bf16.msra.mxu0 0
    %239 = vmatprep.subr.bf16.mxu0 0
    %240 = vmatpush2.bf16.msra.mxu0 0
    %241 = vmatprep.subr.bf16.mxu0 0
    %242 = vmatpush2.bf16.msra.mxu0 0
    %243 = vmatprep.subr.bf16.mxu0 0
    %244 = vmatpush2.bf16.msra.mxu0 0
    %245 = vmatprep.mubr.bf16.mxu0 0
    %246 = vmatmul.mubr.bf16.gmra.mxu0 %v208
    %v247 = vpop.f32.mrf.mxu0
    %v248 = vadd.f32 0.0, %v247
    %v249 = vpop.f32.mrf.mxu0
    %v250 = vpop.f32.mrf.mxu0
    %v251 = vpop.f32.mrf.mxu0
    %252 = vdwg.mxu0
    %v253 = vmul.f32 %v248, %v202
    %v254 = vpack.c.bf16 %v253, %v253
    %v256 = vunpack.c.l.b16 %v254
    %v257 = vpack.c.b16 %v256, %v256
    %258 = vrot.lane.b32.xlu0 %v257, 32
    %v259 = vpop.permute.xlu0 %258
    %vm261 = vcmask 519424
    %262 = vst.msk [vmem:[#allocation2] sm:$0xf] %vm261, %v259
    %263 = vst.msk [vmem:[#allocation5] sm:$0xff] %vm75, %v205
    %v264 = vld [vmem:[#allocation2] sm:$0xf]
    %v265 = vld [vmem:[%s3] sm:$0xf]
    %v266 = vld [vmem:[%s3 + $0x4] sm:$0xf]
    %v267 = vld [vmem:[%s3 + $0x8] sm:$0xf]
    %v268 = vld [vmem:[%s3 + $0xc] sm:$0xf]
    %v269 = vld [vmem:[%s3 + $0x10] sm:$0xf]
    %v270 = vld [vmem:[%s3 + $0x14] sm:$0xf]
    %v271 = vld [vmem:[%s3 + $0x18] sm:$0xf]
    %v272 = vld [vmem:[%s3 + $0x1c] sm:$0xf]
    %v273 = vld [vmem:[%s4] sm:$0x1]
    %v275 = vlaneseq
    %v276 = vshrl.u32 %v275, 7
    %v277 = vsub.s32 0, %v276
    %v278 = vrot.slane %v273, %v277
    %v288 = vunpack.c.l.b16 %v265
    %v289 = vunpack.c.l.b16 %v266
    %v290 = vunpack.c.l.b16 %v267
    %v291 = vunpack.c.l.b16 %v268
    %v292 = vunpack.c.l.b16 %v269
    %v293 = vunpack.c.l.b16 %v270
    %v294 = vunpack.c.l.b16 %v271
    %v295 = vunpack.c.l.b16 %v272
    %v296 = vpack.c.b16 %v289, %v288
    %v297 = vpack.c.b16 %v291, %v290
    %v298 = vpack.c.b16 %v293, %v292
    %v299 = vpack.c.b16 %v295, %v294
    %vm304 = vcmask 523264
    %v306 = vsel %vm304, %v264, 0
    %308 = vmatprep.subr.bf16.mxu0 0
    %309 = vmatpush1.bf16.msra.mxu0 0
    %310 = vmatprep.subr.bf16.mxu0 0
    %311 = vmatpush1.bf16.msra.mxu0 0
    %312 = vmatprep.subr.bf16.mxu0 0
    %313 = vmatpush1.bf16.msra.mxu0 0
    %314 = vmatprep.subr.bf16.mxu0 0
    %315 = vmatpush1.bf16.msra.mxu0 0
    %316 = vmatprep.subr.bf16.mxu0 0
    %317 = vmatpush1.bf16.msra.mxu0 %v299
    %318 = vmatprep.subr.bf16.mxu0 0
    %319 = vmatpush1.bf16.msra.mxu0 %v298
    %320 = vmatprep.subr.bf16.mxu0 0
    %321 = vmatpush1.bf16.msra.mxu0 %v297
    %322 = vmatprep.subr.bf16.mxu0 0
    %323 = vmatpush1.bf16.msra.mxu0 %v296
    %324 = vmatprep.subr.bf16.mxu0 0
    %325 = vmatpush2.bf16.msra.mxu0 0
    %326 = vmatprep.subr.bf16.mxu0 0
    %327 = vmatpush2.bf16.msra.mxu0 0
    %328 = vmatprep.subr.bf16.mxu0 0
    %329 = vmatpush2.bf16.msra.mxu0 0
    %330 = vmatprep.subr.bf16.mxu0 0
    %331 = vmatpush2.bf16.msra.mxu0 0
    %332 = vmatprep.subr.bf16.mxu0 0
    %333 = vmatpush2.bf16.msra.mxu0 0
    %334 = vmatprep.subr.bf16.mxu0 0
    %335 = vmatpush2.bf16.msra.mxu0 0
    %336 = vmatprep.subr.bf16.mxu0 0
    %337 = vmatpush2.bf16.msra.mxu0 0
    %338 = vmatprep.subr.bf16.mxu0 0
    %339 = vmatpush2.bf16.msra.mxu0 0
    %340 = vmatprep.mubr.bf16.mxu0 0
    %341 = vmatmul.mubr.bf16.gmra.mxu0 %v306
    %v342 = vpop.f32.mrf.mxu0
    %v343 = vadd.f32 %v278, %v342
    %v344 = vpop.f32.mrf.mxu0
    %v345 = vpop.f32.mrf.mxu0
    %v346 = vpop.f32.mrf.mxu0
    %347 = vdwg.mxu0
    %348 = vst.msk [vmem:[#allocation3] sm:$0xff] %vm28, %v343
    // Predicated region
    $region22: #{multi_head_attn.3} parent=1 // pred_check
      _
    $region23: #{multi_head_attn.3} parent=1 // pred_check_branch
      %350 = sbr.rel (0) target = $region25
    $region24: #{multi_head_attn.3} parent=1 // pred_region
      %s352 = ssub.s32 128, 128
      %353 = vsyncadd [#allocation4], %s352
      %s355 = sshll.u32 [#allocation3], 4
      %s356 = int_to_ptr.vmem [resolvable:$true] %s355
      %358 = dma.vmem_to_hbm [thread:$0]  %s356, 128, %s5, [#allocation4]
    $region25: #{multi_head_attn.3} parent=1 // pred_fallthru
      _
    // Predicated region
    $region26: #{multi_head_attn.3} parent=1 // pred_check
      _
    $region27: #{multi_head_attn.3} parent=1 // pred_check_branch
      %360 = sbr.rel (0) target = $region29
    $region28: #{multi_head_attn.3} parent=1 // pred_region
      %s362 = ssub.s32 128, 128
      %363 = vsyncadd [#allocation6], %s362
      %s365 = sshll.u32 [#allocation5], 4
      %s366 = int_to_ptr.vmem [resolvable:$true] %s365
      %368 = dma.vmem_to_hbm [thread:$0]  %s366, 128, %s6, [#allocation6]
    $region29: #{multi_head_attn.3} parent=1 // pred_fallthru
      _
    // Predicated region
    $region30: #{multi_head_attn.3} parent=1 // pred_check
      _
    $region31: #{multi_head_attn.3} parent=1 // pred_check_branch
      %370 = sbr.rel (0) target = $region33
    $region32: #{multi_head_attn.3} parent=1 // pred_region
      %371 = dma.done [#allocation4], 128
    $region33: #{multi_head_attn.3} parent=1 // pred_fallthru
      _
    // Predicated region
    $region34: #{multi_head_attn.3} parent=1 // pred_check
      _
    $region35: #{multi_head_attn.3} parent=1 // pred_check_branch
      %373 = sbr.rel (0) target = $region37
    $region36: #{multi_head_attn.3} parent=1 // pred_region
      %374 = dma.done [#allocation6], 128
    $region37: #{multi_head_attn.3} parent=1 // pred_fallthru
      _
    %375 = vsyncpa [#allocation4], 1
    %376 = vsyncpa [#allocation6], 1

</llo_original>
